<compile_context>
chip_gen: v5e
topology: v5e:2x2
jax: 0.10.0
libtpu: 0.0.40
codegen_flags: <defaults>
</compile_context>

<pallas_src>
import functools

import jax
import jax.numpy as jnp
from jax import lax
from jax.experimental import pallas as pl
from jax.experimental.pallas import tpu as pltpu

BITS = 8
QMAX = float(2 ** BITS - 1)            # 255.0
SYM_MAX = float(2 ** (BITS - 1) - 1)   # 127.0

_VMEM_LIMIT = 32 * 1024 * 1024         # raise scoped VMEM limit (safe on v5e/v6e/v7x)


def _round_up(x, m):
    return (x + m - 1) // m * m


# ---------------- Pass 1: global abs-max reduction ----------------
def _absmax_kernel(x_ref, out_ref, run_ref):
    @pl.when(pl.program_id(0) == 0)
    def _():
        run_ref[...] = jnp.zeros_like(run_ref)

    # Per-step work is purely elementwise (VPU): abs + running max into scratch.
    run_ref[...] = jnp.maximum(run_ref[...], jnp.abs(x_ref[...].astype(jnp.float32)))

    # Single cross-lane (XLU) reduction + (1,1) store only at the last step.
    @pl.when(pl.program_id(0) == pl.num_programs(0) - 1)
    def _():
        out_ref[...] = jnp.max(run_ref[...], keepdims=True)


def global_absmax(x2d, tm):
    M, K = x2d.shape
    return pl.pallas_call(
        _absmax_kernel,
        out_shape=jax.ShapeDtypeStruct((1, 1), jnp.float32),
        grid_spec=pltpu.PrefetchScalarGridSpec(
            num_scalar_prefetch=0,
            grid=(M // tm,),
            in_specs=[pl.BlockSpec((tm, K), lambda i: (i, 0))],
            out_specs=pl.BlockSpec((1, 1), lambda i: (0, 0)),
            scratch_shapes=[pltpu.VMEM((tm, K), jnp.float32)],
        ),
        compiler_params=pltpu.CompilerParams(
            dimension_semantics=("arbitrary",),
            vmem_limit_bytes=_VMEM_LIMIT),
    )(x2d)


# ---------------- Pass 2: fake-quantize to integer codes (bf16) ----------------
def _quantize_kernel(scale_ref, x_ref, q_ref):
    scale = scale_ref[0, 0]                                 # scalar from SMEM
    x = x_ref[...].astype(jnp.float32)
    # zero_point = 0 (symmetric). Clamp lower bound of 0 kept faithful to the
    # PyTorch source (it zeroes negative activations before the matmul).
    codes = jnp.round(jnp.clip(x * scale, 0.0, QMAX))       # integers 0..255
    q_ref[...] = codes.astype(q_ref.dtype)                  # exact in bf16


def quantize_to_codes(x2d, scale11, tm):
    M, K = x2d.shape
    return pl.pallas_call(
        _quantize_kernel,
        out_shape=jax.ShapeDtypeStruct((M, K), jnp.bfloat16),
        grid_spec=pltpu.PrefetchScalarGridSpec(
            num_scalar_prefetch=0,
            grid=(M // tm,),
            in_specs=[
                pl.BlockSpec(memory_space=pltpu.MemorySpace.SMEM),  # scale (1,1)
                pl.BlockSpec((tm, K), lambda i: (i, 0)),            # x tile
            ],
            out_specs=pl.BlockSpec((tm, K), lambda i: (i, 0)),
        ),
        compiler_params=pltpu.CompilerParams(
            dimension_semantics=("parallel",),
            vmem_limit_bytes=_VMEM_LIMIT),
    )(scale11, x2d)


# ---------------- Pass 3: tiled bf16 matmul + dequant/bias epilogue ----------------
def _codes_matmul_kernel(inv_ref, x_ref, w_ref, b_ref, o_ref, acc_ref):
    k = pl.program_id(2)

    @pl.when(k == 0)
    def _():
        acc_ref[...] = jnp.zeros_like(acc_ref)

    # bf16 x bf16 -> f32 accumulate: native MXU path on all generations.
    acc_ref[...] += jnp.dot(x_ref[...], w_ref[...],
                            preferred_element_type=jnp.float32)

    @pl.when(k == pl.num_programs(2) - 1)
    def _():
        inv_scale = inv_ref[0, 0]                           # scalar from SMEM
        o_ref[...] = (acc_ref[...] * inv_scale + b_ref[...]).astype(o_ref.dtype)


def codes_matmul(codes, w_kn, b_1n, inv_scale11, tm, tn, tk):
    M, K = codes.shape
    N = w_kn.shape[1]
    return pl.pallas_call(
        _codes_matmul_kernel,
        out_shape=jax.ShapeDtypeStruct((M, N), jnp.float32),
        grid_spec=pltpu.PrefetchScalarGridSpec(
            num_scalar_prefetch=0,
            grid=(M // tm, N // tn, K // tk),
            in_specs=[
                pl.BlockSpec(memory_space=pltpu.MemorySpace.SMEM),      # inv_scale (1,1)
                pl.BlockSpec((tm, tk), lambda i, j, k: (i, k)),         # codes tile
                pl.BlockSpec((tk, tn), lambda i, j, k: (k, j)),         # weight tile
                pl.BlockSpec((1, tn), lambda i, j, k: (0, j)),          # bias tile
            ],
            out_specs=pl.BlockSpec((tm, tn), lambda i, j, k: (i, j)),
            scratch_shapes=[pltpu.VMEM((tm, tn), jnp.float32)],
        ),
        compiler_params=pltpu.CompilerParams(
            dimension_semantics=("parallel", "parallel", "arbitrary"),
            vmem_limit_bytes=_VMEM_LIMIT),
    )(inv_scale11, codes, w_kn, b_1n)


# ---------------- One-time parameter prep (at init, NOT per forward) ----------------
def prepare_linear_params(w_out_in, b_out, weight_dtype=jnp.bfloat16):
    """Transpose PyTorch Linear weight [out,in] -> [in,out] and cast once.

    NOTE: the bf16 weight cast is the only deviation from exact f32 Linear math
    (quantized activation codes 0..255 are exact in bf16). Pass
    weight_dtype=jnp.float32 for bit-faithful (slower) weights.
    """
    w_kn = jnp.asarray(w_out_in).T.astype(weight_dtype)
    b_1n = jnp.asarray(b_out).reshape(1, -1).astype(jnp.float32)
    return w_kn, b_1n


# ---------------- Wrapper: QuantizedModule.forward ----------------
@functools.partial(jax.jit, static_argnames=("tm", "tn", "tk"))
def quantized_module_forward(x_bsh, w_kn, b_1n, *, tm=256, tn=256, tk=512):
    """x: [B, S, H] float; w_kn: [H_in, H_out] (pre-transposed); b_1n: [1, H_out]."""
    B, S, H = x_bsh.shape
    M, K = B * S, H
    N = w_kn.shape[1]
    x2d = x_bsh.reshape(M, K).astype(jnp.float32)

    # Tile selection + padding so no trailing rows are dropped.
    tm_e = min(tm, _round_up(M, 8))
    Mp = _round_up(M, tm_e)
    if Mp != M:
        x2d = jnp.pad(x2d, ((0, Mp - M), (0, 0)))           # zero rows: abs-max/codes unaffected
    tk_e = tk if (K % tk == 0) else K                       # fall back to full-K block
    tn_e = tn if (N % tn == 0) else N                       # fall back to full-N block

    # Pass 1: dynamic-range calibration (global abs-max).
    max_abs = global_absmax(x2d, tm_e)                      # (1,1) f32
    # Guard: torch source would produce inf scale / NaN output for an all-zero input.
    safe_max = jnp.maximum(max_abs, jnp.float32(1e-12))
    scale = (SYM_MAX / safe_max).astype(jnp.float32)        # (1,1)
    inv_scale = (1.0 / scale).astype(jnp.float32)           # (1,1)

    # Pass 2: fake-quantize to integer codes (written once as bf16).
    codes = quantize_to_codes(x2d, scale, tm_e)             # (Mp, K) bf16

    # Pass 3: tiled MXU matmul; dequant scale + bias folded into the epilogue.
    y2d = codes_matmul(codes, w_kn, b_1n, inv_scale, tm_e, tn_e, tk_e)
    return y2d[:M].reshape(B, S, N)


if __name__ == "__main__":
    B, S, H = 2, 8, 32
    key = jax.random.PRNGKey(0)
    kx, kw, kb = jax.random.split(key, 3)

    x = jax.random.normal(kx, (B, S, H), dtype=jnp.float32)
    # deterministic Linear(H, H) params (kaiming-uniform-like bounds)
    bound = 1.0 / (H ** 0.5)
    w = jax.random.uniform(kw, (H, H), minval=-bound, maxval=bound, dtype=jnp.float32)
    b = jax.random.uniform(kb, (H,), minval=-bound, maxval=bound, dtype=jnp.float32)

    w_kn, b_1n = prepare_linear_params(w, b)                # one-time prep (bf16 weight)
    out = quantized_module_forward(x, w_kn, b_1n)
    jax.block_until_ready(out)
    assert out.shape == (B, S, H)

    # Reference 1: exact kernel math (bf16 weight, dequant scale folded after matmul).
    scale_r = SYM_MAX / jnp.max(jnp.abs(x))
    codes_r = jnp.round(jnp.clip(x.reshape(-1, H) * scale_r, 0.0, QMAX))
    y_km = jnp.einsum("mk,kn->mn", codes_r, w_kn.astype(jnp.float32),
                      precision=lax.Precision.HIGHEST) * (1.0 / scale_r) + b
    assert jnp.allclose(out.reshape(-1, H), y_km, atol=1e-4, rtol=1e-4)

    # Reference 2: faithful f32 PyTorch semantics (only delta is the bf16 weight cast).
    xq_ref = jnp.round(jnp.clip(x * scale_r, 0.0, QMAX)) / scale_r
    y_ref = jnp.einsum("bsh,oh->bso", xq_ref, w,
                       precision=lax.Precision.HIGHEST) + b
    assert jnp.allclose(out, y_ref, atol=2e-2, rtol=2e-2)

    print("KERNEL_OK")
</pallas_src>

<mosaic_0001>
module attributes {stable_mosaic.version = 11 : i64} {
  func.func @_absmax_kernel(%arg0: i32, %arg1: memref<16x32xf32, #tpu.memory_space<vmem>>, %arg2: memref<1x1xf32, #tpu.memory_space<vmem>>, %arg3: memref<16x32xf32, #tpu.memory_space<vmem>>) attributes {dimension_semantics = [#tpu.dimension_semantics<arbitrary>], iteration_bounds = array<i64: 1>, scalar_prefetch = 0 : i64, scratch_operands = 1 : i64, tpu.core_type = #tpu.core_type<tc>, window_params = [{transform_indices = @transform_0, window_bounds = array<i64: 16, 32>}, {pipeline_mode = #tpu.pipeline_mode<synchronous>, transform_indices = @transform_1, window_bounds = array<i64: 1, 1>}]} {
    %c0_i32 = arith.constant 0 : i32
    %0 = arith.cmpi eq, %arg0, %c0_i32 : i32
    %1 = arith.extui %0 : i1 to i32
    %c0_i32_0 = arith.constant 0 : i32
    %2 = arith.cmpi ne, %1, %c0_i32_0 : i32
    scf.if %2 {
      %cst = arith.constant 0.000000e+00 : f32
      %11 = vector.broadcast %cst : f32 to vector<16x32xf32>
      %c0_8 = arith.constant 0 : index
      %c0_9 = arith.constant 0 : index
      %12 = vector.load %arg3[%c0_8, %c0_9] : memref<16x32xf32, #tpu.memory_space<vmem>>, vector<16x32xf32>
      tpu.vector_store %arg3[%c0_8, %c0_9], %11 {strides = array<i32>} : memref<16x32xf32, #tpu.memory_space<vmem>>, vector<16x32xf32>,
    } else {
    }
    %c0 = arith.constant 0 : index
    %c0_1 = arith.constant 0 : index
    %3 = vector.load %arg3[%c0, %c0_1] : memref<16x32xf32, #tpu.memory_space<vmem>>, vector<16x32xf32>
    %c0_2 = arith.constant 0 : index
    %c0_3 = arith.constant 0 : index
    %4 = vector.load %arg1[%c0_2, %c0_3] : memref<16x32xf32, #tpu.memory_space<vmem>>, vector<16x32xf32>
    %5 = math.absf %4 : vector<16x32xf32>
    %6 = arith.maximumf %3, %5 : vector<16x32xf32>
    %c0_4 = arith.constant 0 : index
    %c0_5 = arith.constant 0 : index
    %7 = vector.load %arg3[%c0_4, %c0_5] : memref<16x32xf32, #tpu.memory_space<vmem>>, vector<16x32xf32>
    tpu.vector_store %arg3[%c0_4, %c0_5], %6 {strides = array<i32>} : memref<16x32xf32, #tpu.memory_space<vmem>>, vector<16x32xf32>,
    %c0_i32_6 = arith.constant 0 : i32
    %8 = arith.cmpi eq, %arg0, %c0_i32_6 : i32
    %9 = arith.extui %8 : i1 to i32
    %c0_i32_7 = arith.constant 0 : i32
    %10 = arith.cmpi ne, %9, %c0_i32_7 : i32
    scf.if %10 {
      %c0_8 = arith.constant 0 : index
      %c0_9 = arith.constant 0 : index
      %11 = vector.load %arg3[%c0_8, %c0_9] : memref<16x32xf32, #tpu.memory_space<vmem>>, vector<16x32xf32>
      %12 = vector.shape_cast %11 : vector<16x32xf32> to vector<1x16x32xf32>
      %cst = arith.constant dense<0xFF800000> : vector<1xf32>
      %13 = vector.multi_reduction <maximumf>, %12, %cst [1, 2] : vector<1x16x32xf32> to vector<1xf32>
      %14 = vector.shape_cast %13 : vector<1xf32> to vector<1x1x1xf32>
      %15 = vector.extract %14[0, 0, 0] : f32 from vector<1x1x1xf32>
      %16 = vector.broadcast %15 : f32 to vector<1x1xf32>
      %c0_10 = arith.constant 0 : index
      %c0_11 = arith.constant 0 : index
      %17 = vector.load %arg2[%c0_10, %c0_11] : memref<1x1xf32, #tpu.memory_space<vmem>>, vector<1x1xf32>
      tpu.vector_store %arg2[%c0_10, %c0_11], %16 {strides = array<i32>} : memref<1x1xf32, #tpu.memory_space<vmem>>, vector<1x1xf32>,
    } else {
    }
    return
  }
  func.func @transform_0(%arg0: i32) -> (i32, i32) {
    %c0_i32 = arith.constant 0 : i32
    %c0_i32_0 = arith.constant 0 : i32
    return %arg0, %c0_i32 : i32, i32
  }
  func.func @transform_1(%arg0: i32) -> (i32, i32) {
    %c0_i32 = arith.constant 0 : i32
    %c0_i32_0 = arith.constant 0 : i32
    %c0_i32_1 = arith.constant 0 : i32
    return %c0_i32, %c0_i32_0 : i32, i32
  }
}

module attributes {stable_mosaic.version = 11 : i64} {
  func.func @_codes_matmul_kernel(%arg0: i32, %arg1: i32, %arg2: i32, %arg3: memref<1x1xf32, #tpu.memory_space<smem>>, %arg4: memref<16x32xbf16, #tpu.memory_space<vmem>>, %arg5: memref<32x32xbf16, #tpu.memory_space<vmem>>, %arg6: memref<1x32xf32, #tpu.memory_space<vmem>>, %arg7: memref<16x32xf32, #tpu.memory_space<vmem>>, %arg8: memref<16x32xf32, #tpu.memory_space<vmem>>) attributes {dimension_semantics = [#tpu.dimension_semantics<parallel>, #tpu.dimension_semantics<parallel>, #tpu.dimension_semantics<arbitrary>], iteration_bounds = array<i64: 1, 1, 1>, scalar_prefetch = 0 : i64, scratch_operands = 1 : i64, tpu.core_type = #tpu.core_type<tc>, window_params = [{transform_indices = @transform_0, window_bounds = array<i64: 1, 1>}, {transform_indices = @transform_1, window_bounds = array<i64: 16, 32>}, {transform_indices = @transform_2, window_bounds = array<i64: 32, 32>}, {transform_indices = @transform_3, window_bounds = array<i64: 1, 32>}, {transform_indices = @transform_4, window_bounds = array<i64: 16, 32>}]} {
    %c0_i32 = arith.constant 0 : i32
    %0 = arith.cmpi eq, %arg2, %c0_i32 : i32
    %1 = arith.extui %0 : i1 to i32
    %c0_i32_0 = arith.constant 0 : i32
    %2 = arith.cmpi ne, %1, %c0_i32_0 : i32
    scf.if %2 {
      %cst_10 = arith.constant 0.000000e+00 : f32
      %12 = vector.broadcast %cst_10 : f32 to vector<16x32xf32>
      %c0_11 = arith.constant 0 : index
      %c0_12 = arith.constant 0 : index
      %13 = vector.load %arg8[%c0_11, %c0_12] : memref<16x32xf32, #tpu.memory_space<vmem>>, vector<16x32xf32>
      tpu.vector_store %arg8[%c0_11, %c0_12], %12 {strides = array<i32>} : memref<16x32xf32, #tpu.memory_space<vmem>>, vector<16x32xf32>,
    } else {
    }
    %c0 = arith.constant 0 : index
    %c0_1 = arith.constant 0 : index
    %3 = vector.load %arg8[%c0, %c0_1] : memref<16x32xf32, #tpu.memory_space<vmem>>, vector<16x32xf32>
    %c0_2 = arith.constant 0 : index
    %c0_3 = arith.constant 0 : index
    %4 = vector.load %arg4[%c0_2, %c0_3] : memref<16x32xbf16, #tpu.memory_space<vmem>>, vector<16x32xbf16>
    %c0_4 = arith.constant 0 : index
    %c0_5 = arith.constant 0 : index
    %5 = vector.load %arg5[%c0_4, %c0_5] : memref<32x32xbf16, #tpu.memory_space<vmem>>, vector<32x32xbf16>
    %cst = arith.constant dense<0.000000e+00> : vector<16x32xf32>
    %6 = tpu.matmul %4, %5, %cst {dimension_numbers = #tpu.dot_dimension_numbers<[1], [0], [0], [1], [0, 0, 1, 1], [], []>} : vector<16x32xbf16>, vector<32x32xbf16>, vector<16x32xf32> -> vector<16x32xf32>
    %7 = arith.addf %3, %6 : vector<16x32xf32>
    %c0_6 = arith.constant 0 : index
    %c0_7 = arith.constant 0 : index
    %8 = vector.load %arg8[%c0_6, %c0_7] : memref<16x32xf32, #tpu.memory_space<vmem>>, vector<16x32xf32>
    tpu.vector_store %arg8[%c0_6, %c0_7], %7 {strides = array<i32>} : memref<16x32xf32, #tpu.memory_space<vmem>>, vector<16x32xf32>,
    %c0_i32_8 = arith.constant 0 : i32
    %9 = arith.cmpi eq, %arg2, %c0_i32_8 : i32
    %10 = arith.extui %9 : i1 to i32
    %c0_i32_9 = arith.constant 0 : i32
    %11 = arith.cmpi ne, %10, %c0_i32_9 : i32
    scf.if %11 {
      %c0_10 = arith.constant 0 : index
      %c0_11 = arith.constant 0 : index
      %12 = memref.load %arg3[%c0_10, %c0_11] : memref<1x1xf32, #tpu.memory_space<smem>>
      %c0_12 = arith.constant 0 : index
      %c0_13 = arith.constant 0 : index
      %13 = vector.load %arg8[%c0_12, %c0_13] : memref<16x32xf32, #tpu.memory_space<vmem>>, vector<16x32xf32>
      %14 = vector.broadcast %12 : f32 to vector<16x32xf32>
      %15 = arith.mulf %13, %14 : vector<16x32xf32>
      %c0_14 = arith.constant 0 : index
      %c0_15 = arith.constant 0 : index
      %16 = vector.load %arg6[%c0_14, %c0_15] : memref<1x32xf32, #tpu.memory_space<vmem>>, vector<1x32xf32>
      %17 = vector.broadcast %16 : vector<1x32xf32> to vector<16x32xf32>
      %18 = arith.addf %15, %17 : vector<16x32xf32>
      %c0_16 = arith.constant 0 : index
      %c0_17 = arith.constant 0 : index
      %19 = vector.load %arg7[%c0_16, %c0_17] : memref<16x32xf32, #tpu.memory_space<vmem>>, vector<16x32xf32>
      tpu.vector_store %arg7[%c0_16, %c0_17], %18 {strides = array<i32>} : memref<16x32xf32, #tpu.memory_space<vmem>>, vector<16x32xf32>,
    } else {
    }
    return
  }
  func.func @transform_0(%arg0: i32, %arg1: i32, %arg2: i32) -> (i32, i32) {
    %c0_i32 = arith.constant 0 : i32
    %c0_i32_0 = arith.constant 0 : i32
    %c0_i32_1 = arith.constant 0 : i32
    return %c0_i32, %c0_i32_0 : i32, i32
  }
  func.func @transform_1(%arg0: i32, %arg1: i32, %arg2: i32) -> (i32, i32) {
    %c0_i32 = arith.constant 0 : i32
    return %arg0, %arg2 : i32, i32
  }
  func.func @transform_2(%arg0: i32, %arg1: i32, %arg2: i32) -> (i32, i32) {
    %c0_i32 = arith.constant 0 : i32
    return %arg2, %arg1 : i32, i32
  }
  func.func @transform_3(%arg0: i32, %arg1: i32, %arg2: i32) -> (i32, i32) {
    %c0_i32 = arith.constant 0 : i32
    %c0_i32_0 = arith.constant 0 : i32
    return %c0_i32, %arg1 : i32, i32
  }
  func.func @transform_4(%arg0: i32, %arg1: i32, %arg2: i32) -> (i32, i32) {
    %c0_i32 = arith.constant 0 : i32
    return %arg0, %arg1 : i32, i32
  }
}

module attributes {stable_mosaic.version = 11 : i64} {
  func.func @_quantize_kernel(%arg0: i32, %arg1: memref<1x1xf32, #tpu.memory_space<smem>>, %arg2: memref<16x32xf32, #tpu.memory_space<vmem>>, %arg3: memref<16x32xbf16, #tpu.memory_space<vmem>>) attributes {dimension_semantics = [#tpu.dimension_semantics<parallel>], iteration_bounds = array<i64: 1>, scalar_prefetch = 0 : i64, scratch_operands = 0 : i64, tpu.core_type = #tpu.core_type<tc>, window_params = [{transform_indices = @transform_0, window_bounds = array<i64: 1, 1>}, {transform_indices = @transform_1, window_bounds = array<i64: 16, 32>}, {transform_indices = @transform_2, window_bounds = array<i64: 16, 32>}]} {
    %c0 = arith.constant 0 : index
    %c0_0 = arith.constant 0 : index
    %0 = memref.load %arg1[%c0, %c0_0] : memref<1x1xf32, #tpu.memory_space<smem>>
    %c0_1 = arith.constant 0 : index
    %c0_2 = arith.constant 0 : index
    %1 = vector.load %arg2[%c0_1, %c0_2] : memref<16x32xf32, #tpu.memory_space<vmem>>, vector<16x32xf32>
    %2 = vector.broadcast %0 : f32 to vector<16x32xf32>
    %3 = arith.mulf %1, %2 : vector<16x32xf32>
    %cst = arith.constant 0.000000e+00 : f32
    %cst_3 = arith.constant 2.550000e+02 : f32
    %4 = vector.broadcast %cst : f32 to vector<16x32xf32>
    %5 = arith.maximumf %4, %3 : vector<16x32xf32>
    %6 = vector.broadcast %cst_3 : f32 to vector<16x32xf32>
    %7 = arith.minimumf %6, %5 : vector<16x32xf32>
    %8 = math.roundeven %7 : vector<16x32xf32>
    %9 = arith.truncf %8 : vector<16x32xf32> to vector<16x32xbf16>
    %c0_4 = arith.constant 0 : index
    %c0_5 = arith.constant 0 : index
    %10 = vector.load %arg3[%c0_4, %c0_5] : memref<16x32xbf16, #tpu.memory_space<vmem>>, vector<16x32xbf16>
    tpu.vector_store %arg3[%c0_4, %c0_5], %9 {strides = array<i32>} : memref<16x32xbf16, #tpu.memory_space<vmem>>, vector<16x32xbf16>,
    return
  }
  func.func @transform_0(%arg0: i32) -> (i32, i32) {
    %c0_i32 = arith.constant 0 : i32
    %c0_i32_0 = arith.constant 0 : i32
    %c0_i32_1 = arith.constant 0 : i32
    return %c0_i32, %c0_i32_0 : i32, i32
  }
  func.func @transform_1(%arg0: i32) -> (i32, i32) {
    %c0_i32 = arith.constant 0 : i32
    %c0_i32_0 = arith.constant 0 : i32
    return %arg0, %c0_i32 : i32, i32
  }
  func.func @transform_2(%arg0: i32) -> (i32, i32) {
    %c0_i32 = arith.constant 0 : i32
    %c0_i32_0 = arith.constant 0 : i32
    return %arg0, %c0_i32 : i32, i32
  }
}

</mosaic_0001>

<llo_original>
// kernel: quantized_module_forward.5
$region0: #{quantized_module_forward.5}
  #allocation0 [shape = 'u32[]', space=smem, size = 0x4, offset = 0x4, fixed_abs, tag = 'smem constant byte address 0x4 - core index']
  #allocation1 [shape = 'u32[72,128]{1,0:T(1,128)}', space=vmem, size = 0x9000, scoped, tag = 'internal scratch']
  #allocation2 [shape = 'f32[16,32]{1,0:T(8,128)}', space=vmem, size = 0x2000, scoped, tag = 'scratch operand']
  #allocation3 [shape = 'f32[1,1]{1,0:T(1,128)S(6)}', space=smem, size = 0x200, scoped, tag = 'scoped memory for quantized_module_forward.5']
  %s0 = inlined_call_operand.<no memory space> [shape: f32[1,1], index: 0, kind: input, shape index: {}]
  %s1 = inlined_call_operand.vmem [shape: bf16[16,32], index: 1, kind: input, shape index: {}]
  %s2 = inlined_call_operand.hbm [shape: bf16[32,32], index: 2, kind: input, shape index: {}]
  %s3 = inlined_call_operand.vmem [shape: f32[1,32], index: 3, kind: input, shape index: {}]
  %s4 = inlined_call_operand.hbm [shape: f32[16,32], index: 4, kind: output, shape index: {}]
  %s5 = sld [smem:[#allocation0]]
  $region38: #{quantized_module_forward.5} parent=0
    _
  %s7 = ssub.s32 1, %s5
  %s8 = scalar_select 0, %s7, %s5
  %9 = sst [smem:[#allocation3]] %s0
  $region1: #{quantized_module_forward.5} parent=0
    #allocation4 [shape = 'u8[8192]{0}', space=vmem, size = 0x2000, scoped, tag = 'input window, operand 2, single buffered']
    #allocation5 [shape = 's32[1]{0}', space=sflag, size = 0x4, scoped, tag = 'scoped memory for quantized_module_forward.5']
    #allocation6 [shape = 's32[1]{0}', space=sflag, size = 0x4, scoped, tag = 'scoped memory for quantized_module_forward.5']
    #allocation7 [shape = 'u8[8192]{0}', space=vmem, size = 0x2000, scoped, tag = 'output window, operand 0, single buffered']
    %10 = vsyncpa [#allocation5], 0
    %11 = vsyncpa [#allocation6], 0
    // Predicated region
    $region2: #{quantized_module_forward.5} parent=1 // pred_check
      _
    $region3: #{quantized_module_forward.5} parent=1 // pred_check_branch
      %13 = sbr.rel (0) target = $region5
    $region4: #{quantized_module_forward.5} parent=1 // pred_region
      _
    $region5: #{quantized_module_forward.5} parent=1 // pred_fallthru
      _
    // Predicated region
    $region6: #{quantized_module_forward.5} parent=1 // pred_check
      _
    $region7: #{quantized_module_forward.5} parent=1 // pred_check_branch
      %15 = sbr.rel (0) target = $region9
    $region8: #{quantized_module_forward.5} parent=1 // pred_region
      _
    $region9: #{quantized_module_forward.5} parent=1 // pred_fallthru
      _
    // Predicated region
    $region10: #{quantized_module_forward.5} parent=1 // pred_check
      _
    $region11: #{quantized_module_forward.5} parent=1 // pred_check_branch
      %17 = sbr.rel (0) target = $region13
    $region12: #{quantized_module_forward.5} parent=1 // pred_region
      %19 = vsyncadd [#allocation5], 0
      %s20 = sshll.u32 %s2, 4
      %s21 = int_to_ptr.hbm [resolvable:$true] %s20
      %s22 = sshll.u32 [#allocation4], 4
      %s23 = int_to_ptr.vmem [resolvable:$true] %s22
      %28 = dma.hbm_to_vmem [thread:$0]  %s21, 256, %s23, [#allocation5], 64, 64, 4
    $region13: #{quantized_module_forward.5} parent=1 // pred_fallthru
      _
    // Predicated region
    $region14: #{quantized_module_forward.5} parent=1 // pred_check
      _
    $region15: #{quantized_module_forward.5} parent=1 // pred_check_branch
      %30 = sbr.rel (0) target = $region17
    $region16: #{quantized_module_forward.5} parent=1 // pred_region
      _
    $region17: #{quantized_module_forward.5} parent=1 // pred_fallthru
      _
    // Predicated region
    $region18: #{quantized_module_forward.5} parent=1 // pred_check
      _
    $region19: #{quantized_module_forward.5} parent=1 // pred_check_branch
      %32 = sbr.rel (0) target = $region21
    $region20: #{quantized_module_forward.5} parent=1 // pred_region
      %34 = dma.done [#allocation5], 256
    $region21: #{quantized_module_forward.5} parent=1 // pred_fallthru
      _
    %p36 = scmp.eq.s32.totalorder 0, 0
    // Predicated region
    $region22: #{quantized_module_forward.5} parent=1 // pred_check
      %p37 = pneg %p36
    $region23: #{quantized_module_forward.5} parent=1 // pred_check_branch
      %39 = sbr.rel (%p37) target = $region25
    $region24: #{quantized_module_forward.5} parent=1 // pred_region
      %vm40 = vcmask 261120
      %41 = vst.msk [vmem:[#allocation2] sm:$0xff] %vm40, 0.0
      %42 = vst.msk [vmem:[#allocation2 + $0x8] sm:$0xff] %vm40, 0.0
    $region25: #{quantized_module_forward.5} parent=1 // pred_fallthru
      _
    %v43 = vld [vmem:[#allocation2] sm:$0xff]
    %v44 = vld [vmem:[#allocation2 + $0x8] sm:$0xff]
    %v45 = vld [vmem:[%s1] sm:$0xf]
    %v46 = vld [vmem:[%s1 + $0x4] sm:$0xf]
    %v47 = vld [vmem:[#allocation4] sm:$0xf]
    %v48 = vld [vmem:[#allocation4 + $0x4] sm:$0xf]
    %v49 = vld [vmem:[#allocation4 + $0x8] sm:$0xf]
    %v50 = vld [vmem:[#allocation4 + $0xc] sm:$0xf]
    %v53 = vunpack.c.l.b16 %v45
    %v54 = vunpack.c.l.b16 %v46
    %v55 = vpack.c.b16 %v54, %v53
    %v60 = vunpack.c.l.b16 %v47
    %v61 = vunpack.c.l.b16 %v48
    %v62 = vunpack.c.l.b16 %v49
    %v63 = vunpack.c.l.b16 %v50
    %v64 = vpack.c.b16 %v61, %v60
    %v65 = vpack.c.b16 %v63, %v62
    %vm68 = vcmask 261120
    %v70 = vsel %vm68, %v55, 0
    %72 = vmatpush.bf16.msra.mxu0 0
    %73 = vmatpush.bf16.msra.mxu0 0
    %74 = vmatpush.bf16.msra.mxu0 0
    %75 = vmatpush.bf16.msra.mxu0 0
    %76 = vmatpush.bf16.msra.mxu0 0
    %77 = vmatpush.bf16.msra.mxu0 0
    %78 = vmatpush.bf16.msra.mxu0 %v65
    %79 = vmatpush.bf16.msra.mxu0 %v64
    %80 = vmatmul.bf16.gmra.mxu0 %v70
    %v81 = vpop.f32.mrf.mxu0
    %v82 = vadd.f32 0.0, %v81
    %v83 = vpop.f32.mrf.mxu0
    %v84 = vadd.f32 0.0, %v83
    %85 = vdwg.mxu0
    %v86 = vadd.f32 %v43, %v82
    %v87 = vadd.f32 %v44, %v84
    %88 = vst.msk [vmem:[#allocation2] sm:$0xff] %vm68, %v86
    %89 = vst.msk [vmem:[#allocation2 + $0x8] sm:$0xff] %vm68, %v87
    // Predicated region
    $region26: #{quantized_module_forward.5} parent=1 // pred_check
      %p90 = pneg %p36
    $region27: #{quantized_module_forward.5} parent=1 // pred_check_branch
      %92 = sbr.rel (%p90) target = $region29
    $region28: #{quantized_module_forward.5} parent=1 // pred_region
      %s93 = sld [smem:[#allocation3]]
      %v94 = vld [vmem:[#allocation2] sm:$0xff]
      %v95 = vld [vmem:[#allocation2 + $0x8] sm:$0xff]
      %v96 = vstv %s93
      %v97 = vmul.f32 %v94, %v96
      %v98 = vmul.f32 %v95, %v96
      %v99 = vld [vmem:[%s3] sm:$0x1]
      %v101 = vperm.slane %v99, 0
      %v103 = vadd.f32 %v97, %v101
      %v104 = vadd.f32 %v98, %v101
      %105 = vst.msk [vmem:[#allocation7] sm:$0xff] %vm68, %v103
      %106 = vst.msk [vmem:[#allocation7 + $0x8] sm:$0xff] %vm68, %v104
    $region29: #{quantized_module_forward.5} parent=1 // pred_fallthru
      _
    // Predicated region
    $region30: #{quantized_module_forward.5} parent=1 // pred_check
      _
    $region31: #{quantized_module_forward.5} parent=1 // pred_check_branch
      %108 = sbr.rel (0) target = $region33
    $region32: #{quantized_module_forward.5} parent=1 // pred_region
      %110 = vsyncadd [#allocation6], 0
      %s111 = sshll.u32 [#allocation7], 4
      %s112 = int_to_ptr.vmem [resolvable:$true] %s111
      %s113 = sshll.u32 %s4, 4
      %s114 = int_to_ptr.hbm [resolvable:$true] %s113
      %119 = dma.vmem_to_hbm [thread:$0]  %s112, 256, %s114, [#allocation6], 128, 128, 8
    $region33: #{quantized_module_forward.5} parent=1 // pred_fallthru
      _
    // Predicated region
    $region34: #{quantized_module_forward.5} parent=1 // pred_check
      _
    $region35: #{quantized_module_forward.5} parent=1 // pred_check_branch
      %121 = sbr.rel (0) target = $region37
    $region36: #{quantized_module_forward.5} parent=1 // pred_region
      %123 = dma.done [#allocation6], 256
    $region37: #{quantized_module_forward.5} parent=1 // pred_fallthru
      _
    %124 = vsyncpa [#allocation5], 1
    %125 = vsyncpa [#allocation6], 1

// kernel: quantized_module_forward.4
$region0: #{quantized_module_forward.4}
  #allocation0 [shape = 'u32[]', space=smem, size = 0x4, offset = 0x4, fixed_abs, tag = 'smem constant byte address 0x4 - core index']
  #allocation1 [shape = 'u32[72,128]{1,0:T(1,128)}', space=vmem, size = 0x9000, scoped, tag = 'internal scratch']
  #allocation2 [shape = 'f32[1,1]{1,0:T(1,128)S(6)}', space=smem, size = 0x200, scoped, tag = 'scoped memory for quantized_module_forward.4']
  %s0 = inlined_call_operand.<no memory space> [shape: f32[1,1], index: 0, kind: input, shape index: {}]
  %s1 = inlined_call_operand.hbm [shape: f32[16,32], index: 1, kind: input, shape index: {}]
  %s2 = inlined_call_operand.vmem [shape: bf16[16,32], index: 2, kind: output, shape index: {}]
  %s3 = sld [smem:[#allocation0]]
  $region22: #{quantized_module_forward.4} parent=0
    _
  %s5 = ssub.s32 1, %s3
  %s6 = scalar_select 0, %s5, %s3
  %7 = sst [smem:[#allocation2]] %s0
  $region1: #{quantized_module_forward.4} parent=0
    #allocation3 [shape = 'u8[8192]{0}', space=vmem, size = 0x2000, scoped, tag = 'input window, operand 1, single buffered']
    #allocation4 [shape = 's32[1]{0}', space=sflag, size = 0x4, scoped, tag = 'scoped memory for quantized_module_forward.4']
    %8 = vsyncpa [#allocation4], 0
    // Predicated region
    $region2: #{quantized_module_forward.4} parent=1 // pred_check
      _
    $region3: #{quantized_module_forward.4} parent=1 // pred_check_branch
      %10 = sbr.rel (0) target = $region5
    $region4: #{quantized_module_forward.4} parent=1 // pred_region
      _
    $region5: #{quantized_module_forward.4} parent=1 // pred_fallthru
      _
    // Predicated region
    $region6: #{quantized_module_forward.4} parent=1 // pred_check
      _
    $region7: #{quantized_module_forward.4} parent=1 // pred_check_branch
      %12 = sbr.rel (0) target = $region9
    $region8: #{quantized_module_forward.4} parent=1 // pred_region
      %14 = vsyncadd [#allocation4], 0
      %s15 = sshll.u32 %s1, 4
      %s16 = int_to_ptr.hbm [resolvable:$true] %s15
      %s17 = sshll.u32 [#allocation3], 4
      %s18 = int_to_ptr.vmem [resolvable:$true] %s17
      %23 = dma.hbm_to_vmem [thread:$0]  %s16, 256, %s18, [#allocation4], 128, 128, 8
    $region9: #{quantized_module_forward.4} parent=1 // pred_fallthru
      _
    // Predicated region
    $region10: #{quantized_module_forward.4} parent=1 // pred_check
      _
    $region11: #{quantized_module_forward.4} parent=1 // pred_check_branch
      %25 = sbr.rel (0) target = $region13
    $region12: #{quantized_module_forward.4} parent=1 // pred_region
      %27 = dma.done [#allocation4], 256
    $region13: #{quantized_module_forward.4} parent=1 // pred_fallthru
      _
    %s28 = sld [smem:[#allocation2]]
    %v29 = vld [vmem:[#allocation3] sm:$0xff]
    %v30 = vld [vmem:[#allocation3 + $0x8] sm:$0xff]
    %v31 = vstv %s28
    %v32 = vmul.f32 %v29, %v31
    %v33 = vmul.f32 %v30, %v31
    %v34 = vmax.f32 %v32, 0.0
    %v35 = vmax.f32 %v33, 0.0
    %v36 = vmin.f32 %v34, 255.0
    %v37 = vmin.f32 %v35, 255.0
    %v38 = vround.ne.pseudo %v36
    %v39 = vround.ne.pseudo %v37
    %v40 = vpack.c.bf16 %v38, %v38
    %v41 = vpack.c.bf16 %v39, %v39
    %vm42 = vcmask 257024
    %43 = vst.msk [vmem:[%s2] sm:$0xf] %vm42, %v40
    %44 = vst.msk [vmem:[%s2 + $0x4] sm:$0xf] %vm42, %v41
    // Predicated region
    $region14: #{quantized_module_forward.4} parent=1 // pred_check
      _
    $region15: #{quantized_module_forward.4} parent=1 // pred_check_branch
      %46 = sbr.rel (0) target = $region17
    $region16: #{quantized_module_forward.4} parent=1 // pred_region
      _
    $region17: #{quantized_module_forward.4} parent=1 // pred_fallthru
      _
    // Predicated region
    $region18: #{quantized_module_forward.4} parent=1 // pred_check
      _
    $region19: #{quantized_module_forward.4} parent=1 // pred_check_branch
      %48 = sbr.rel (0) target = $region21
    $region20: #{quantized_module_forward.4} parent=1 // pred_region
      _
    $region21: #{quantized_module_forward.4} parent=1 // pred_fallthru
      _
    %49 = vsyncpa [#allocation4], 1

// kernel: quantized_module_forward.3
$region0: #{quantized_module_forward.3}
  #allocation0 [shape = 'u32[]', space=smem, size = 0x4, offset = 0x4, fixed_abs, tag = 'smem constant byte address 0x4 - core index']
  #allocation1 [shape = 'u32[72,128]{1,0:T(1,128)}', space=vmem, size = 0x9000, scoped, tag = 'internal scratch']
  #allocation2 [shape = 'f32[16,32]{1,0:T(8,128)}', space=vmem, size = 0x2000, scoped, tag = 'scratch operand']
  %s0 = inlined_call_operand.hbm [shape: f32[16,32], index: 0, kind: input, shape index: {}]
  %s1 = inlined_call_operand.hbm [shape: f32[1,1], index: 1, kind: output, shape index: {}]
  %s2 = sld [smem:[#allocation0]]
  $region26: #{quantized_module_forward.3} parent=0
    _
  %s4 = ssub.s32 1, %s2
  %s5 = scalar_select 0, %s4, %s2
  $region1: #{quantized_module_forward.3} parent=0
    #allocation3 [shape = 'u8[8192]{0}', space=vmem, size = 0x2000, scoped, tag = 'input window, operand 0, single buffered']
    #allocation4 [shape = 's32[1]{0}', space=sflag, size = 0x4, scoped, tag = 'scoped memory for quantized_module_forward.3']
    #allocation5 [shape = 's32[1]{0}', space=sflag, size = 0x4, scoped, tag = 'scoped memory for quantized_module_forward.3']
    #allocation6 [shape = 'u8[512]{0}', space=vmem, size = 0x400, scoped, tag = 'output window, operand 0, single buffered']
    %6 = vsyncpa [#allocation4], 0
    %7 = vsyncpa [#allocation5], 0
    // Predicated region
    $region2: #{quantized_module_forward.3} parent=1 // pred_check
      _
    $region3: #{quantized_module_forward.3} parent=1 // pred_check_branch
      %9 = sbr.rel (0) target = $region5
    $region4: #{quantized_module_forward.3} parent=1 // pred_region
      %11 = vsyncadd [#allocation4], 0
      %s12 = sshll.u32 %s0, 4
      %s13 = int_to_ptr.hbm [resolvable:$true] %s12
      %s14 = sshll.u32 [#allocation3], 4
      %s15 = int_to_ptr.vmem [resolvable:$true] %s14
      %20 = dma.hbm_to_vmem [thread:$0]  %s13, 256, %s15, [#allocation4], 128, 128, 8
    $region5: #{quantized_module_forward.3} parent=1 // pred_fallthru
      _
    // Predicated region
    $region6: #{quantized_module_forward.3} parent=1 // pred_check
      _
    $region7: #{quantized_module_forward.3} parent=1 // pred_check_branch
      %22 = sbr.rel (0) target = $region9
    $region8: #{quantized_module_forward.3} parent=1 // pred_region
      %24 = dma.done [#allocation4], 256
    $region9: #{quantized_module_forward.3} parent=1 // pred_fallthru
      _
    %p25 = scmp.eq.s32.totalorder 0, 0
    // Predicated region
    $region10: #{quantized_module_forward.3} parent=1 // pred_check
      %p26 = pneg %p25
    $region11: #{quantized_module_forward.3} parent=1 // pred_check_branch
      %28 = sbr.rel (%p26) target = $region13
    $region12: #{quantized_module_forward.3} parent=1 // pred_region
      %vm29 = vcmask 261120
      %30 = vst.msk [vmem:[#allocation2] sm:$0xff] %vm29, 0.0
      %31 = vst.msk [vmem:[#allocation2 + $0x8] sm:$0xff] %vm29, 0.0
    $region13: #{quantized_module_forward.3} parent=1 // pred_fallthru
      _
    %v32 = vld [vmem:[#allocation2] sm:$0xff]
    %v33 = vld [vmem:[#allocation2 + $0x8] sm:$0xff]
    %v34 = vld [vmem:[#allocation3] sm:$0xff]
    %v35 = vld [vmem:[#allocation3 + $0x8] sm:$0xff]
    %v36 = vand.u32 2147483647, %v34
    %v37 = vand.u32 2147483647, %v35
    %v38 = vmax.f32 %v32, %v36
    %v39 = vmax.f32 %v33, %v37
    %vm40 = vcmask 261120
    %41 = vst.msk [vmem:[#allocation2] sm:$0xff] %vm40, %v38
    %42 = vst.msk [vmem:[#allocation2 + $0x8] sm:$0xff] %vm40, %v39
    // Predicated region
    $region14: #{quantized_module_forward.3} parent=1 // pred_check
      %p43 = pneg %p25
    $region15: #{quantized_module_forward.3} parent=1 // pred_check_branch
      %45 = sbr.rel (%p43) target = $region17
    $region16: #{quantized_module_forward.3} parent=1 // pred_region
      %v46 = vld [vmem:[#allocation2] sm:$0xff]
      %v47 = vld [vmem:[#allocation2 + $0x8] sm:$0xff]
      %v48 = vsel %vm40, %v46, -inf
      %v49 = vsel %vm40, %v47, -inf
      %v50 = vmax.f32 %v48, %v49
      %51 = vmax.xlane.f32.xlu0 %v50
      %v52 = vpop.xlane.xlu0 %51
      %v53 = vrot.slane %v52, 4
      %v54 = vmax.f32 %v52, %v53
      %v55 = vrot.slane %v54, 2
      %v56 = vmax.f32 %v54, %v55
      %v57 = vrot.slane %v56, 1
      %v58 = vmax.f32 %v56, %v57
      %s59 = vtos %v58
      %v60 = vstv %s59
      %vm61 = vcmask 0
      %62 = vst.msk [vmem:[#allocation6] sm:$0x1] %vm61, %v60
    $region17: #{quantized_module_forward.3} parent=1 // pred_fallthru
      _
    // Predicated region
    $region18: #{quantized_module_forward.3} parent=1 // pred_check
      _
    $region19: #{quantized_module_forward.3} parent=1 // pred_check_branch
      %64 = sbr.rel (0) target = $region21
    $region20: #{quantized_module_forward.3} parent=1 // pred_region
      %66 = vsyncadd [#allocation5], 0
      %s68 = sshll.u32 [#allocation6], 4
      %s69 = int_to_ptr.vmem [resolvable:$true] %s68
      %s70 = sshll.u32 %s1, 4
      %s71 = int_to_ptr.hbm [resolvable:$true] %s70
      %73 = dma.vmem_to_hbm [thread:$0]  %s69, 16, %s71, [#allocation5]
    $region21: #{quantized_module_forward.3} parent=1 // pred_fallthru
      _
    // Predicated region
    $region22: #{quantized_module_forward.3} parent=1 // pred_check
      _
    $region23: #{quantized_module_forward.3} parent=1 // pred_check_branch
      %75 = sbr.rel (0) target = $region25
    $region24: #{quantized_module_forward.3} parent=1 // pred_region
      %77 = dma.done [#allocation5], 16
    $region25: #{quantized_module_forward.3} parent=1 // pred_fallthru
      _
    %78 = vsyncpa [#allocation4], 1
    %79 = vsyncpa [#allocation5], 1

</llo_original>
